<compile_context>
chip_gen: v5e
topology: v5e:2x2
jax: 0.10.0
libtpu: 0.0.40
codegen_flags: <defaults>
</compile_context>

<pallas_src>
import math

import jax
import jax.numpy as jnp
from jax import lax
from jax.experimental import pallas as pl
from jax.experimental.pallas import tpu as pltpu


# ----------------------------------------------------------------------------
# RNG: splitmix32-style hash of the pair index -> uniform [0, 1).
# Deterministic from `seed`; pair-sharing and batch/frame consistency hold by
# construction.  (Not bit-identical to torch.bernoulli_, like any reimpl.)
# ----------------------------------------------------------------------------
def _uniform_from_hash(seed_i32, idx_i32):
    z = seed_i32 + idx_i32 * jnp.int32(-1640531527)      # 0x9E3779B9
    z = z ^ lax.shift_right_logical(z, 16)
    z = z * jnp.int32(-2048144789)                       # 0x85EBCA6B
    z = z ^ lax.shift_right_logical(z, 13)
    z = z * jnp.int32(-1028477387)                       # 0xC2B2AE35
    z = z ^ lax.shift_right_logical(z, 16)
    return lax.shift_right_logical(z, 9).astype(jnp.float32) * (1.0 / float(1 << 23))


def _build_mask(seed, width, landmark, p, dtype):
    """(1, width) fused keep*scale mask; width % landmark == 0."""
    lane = jnp.arange(width, dtype=jnp.int32)
    pair = (lane % jnp.int32(landmark)) // 2             # repeat_interleave(2) pairing
    u = _uniform_from_hash(jnp.int32(seed), pair)
    scale = 1.0 / (1.0 - p)
    mask = jnp.where(u < jnp.float32(1.0 - p), jnp.float32(scale), jnp.float32(0.0))
    return mask.astype(dtype)[None, :]


# ----------------------------------------------------------------------------
# Kernel: one native-dtype multiply per element (pure HBM-bandwidth streaming).
# ----------------------------------------------------------------------------
def _landmark_dropout_kernel(mask_ref, x_ref, o_ref):
    # x_ref/o_ref block: (tile_rows, width); mask_ref: (1, width).
    # Sublane broadcast happens inside the multiply.
    o_ref[...] = x_ref[...] * mask_ref[...]


def _pack_factor(landmark, n_rows):
    # Smallest k with (k*landmark) % 128 == 0 is 128 // gcd(landmark, 128); it is
    # a power of two, so halve until it divides the number of batch*frame rows.
    k = 128 // math.gcd(landmark, 128)
    while k > 1 and n_rows % k != 0:
        k //= 2
    return k


def _choose_tile_rows(rows, width, itemsize):
    if rows <= 8:
        return rows
    # ~4 MiB per input buffer; with double-buffered in + out that is ~16 MiB,
    # comfortably inside the scoped-VMEM default on v5e/v6e and v7x's 64 MiB.
    by_vmem = max(8, (4 * 1024 * 1024) // max(1, width * itemsize))
    target = min(2048, by_vmem)
    target = max(8, (target // 8) * 8)
    if rows <= target:
        return rows        # full-extent second-to-last dim is always legal
    return target


def landmark_dropout(x, seed, p=0.5, training=True):
    """Pallas TPU implementation of LandmarkDropout.forward.

    x: (batch, frame, landmark); seed: python int / int32 scalar.
    """
    if p < 0 or p > 1:
        raise ValueError(
            "dropout probability has to be between 0 and 1, but got {}".format(p))
    if not training or p == 0.0:
        return x
    if p == 1.0:
        return jnp.zeros_like(x)   # torch dropout with p=1 -> zeros, not NaN

    batch, frame, landmark = x.shape
    if landmark % 2 != 0:
        raise ValueError("landmark count must be even (x/y coordinate pairs)")

    n_rows = batch * frame
    k = _pack_factor(landmark, n_rows)     # pack k landmark-rows per output row
    width = k * landmark                   # lane-dense last dim when possible
    rows = n_rows // k
    x2d = x.reshape(rows, width)

    tile_rows = _choose_tile_rows(rows, width, x.dtype.itemsize)
    grid = (pl.cdiv(rows, tile_rows),)

    # Tiny (1, width) mask, keep*scale fused, in the input dtype.  Column c maps
    # to landmark index c % landmark because width is a multiple of landmark.
    mask = _build_mask(seed, width, landmark, float(p), x.dtype)

    out2d = pl.pallas_call(
        _landmark_dropout_kernel,
        out_shape=jax.ShapeDtypeStruct((rows, width), x.dtype),
        grid=grid,
        in_specs=[
            pl.BlockSpec((1, width), lambda i: (0, 0)),           # mask (resident)
            pl.BlockSpec((tile_rows, width), lambda i: (i, 0)),   # x row tile
        ],
        out_specs=pl.BlockSpec((tile_rows, width), lambda i: (i, 0)),
        compiler_params=pltpu.CompilerParams(
            dimension_semantics=("parallel",)),   # independent tiles -> v7x 2-TC shard
    )(mask, x2d)
    return out2d.reshape(batch, frame, landmark)


# ----------------------------------------------------------------------------
# Pure-JAX reference (same hash) for correctness checks.
# ----------------------------------------------------------------------------
def _landmark_dropout_ref(x, seed, p):
    _, frame, landmark = x.shape
    mask = _build_mask(seed, landmark, landmark, float(p), x.dtype)   # (1, landmark)
    return x * mask[None, :, :]


if __name__ == "__main__":
    key = jax.random.PRNGKey(0)
    batch, frame, landmark = 2, 8, 16      # landmark even (x/y coordinate pairs)
    p = 0.5
    seed = 1234

    x = jax.random.normal(key, (batch, frame, landmark), dtype=jnp.float32)

    out = jax.block_until_ready(landmark_dropout(x, seed, p=p, training=True))
    ref = _landmark_dropout_ref(x, seed, p)
    assert out.shape == x.shape and out.dtype == x.dtype
    assert jnp.allclose(out, ref, atol=1e-6), "mismatch vs reference"

    # Semantic checks: mask identical across batch/frames, pairs share a draw.
    ratio = jnp.where(jnp.abs(x) > 1e-12, out / jnp.where(x == 0, 1.0, x), 0.0)
    col_mask = ratio[0, 0, :]              # per-landmark mask (values in {0, 1/(1-p)})
    assert jnp.allclose(ratio, jnp.broadcast_to(col_mask, ratio.shape), atol=1e-5)
    assert jnp.allclose(col_mask[0::2], col_mask[1::2], atol=1e-5)

    # Second shape: non-power-of-two landmark count exercises the packing path.
    b2, f2, l2 = 3, 10, 68
    x2 = jax.random.normal(jax.random.PRNGKey(1), (b2, f2, l2), dtype=jnp.float32)
    out2 = jax.block_until_ready(landmark_dropout(x2, seed, p=0.3, training=True))
    ref2 = _landmark_dropout_ref(x2, seed, 0.3)
    assert out2.shape == x2.shape
    assert jnp.allclose(out2, ref2, atol=1e-6), "mismatch vs reference (shape 2)"

    # Eval mode is identity; p == 1 gives zeros (not NaN); p == 0 is identity.
    out_eval = jax.block_until_ready(landmark_dropout(x, seed, p=p, training=False))
    assert jnp.array_equal(out_eval, x)
    out_p1 = jax.block_until_ready(landmark_dropout(x, seed, p=1.0, training=True))
    assert jnp.array_equal(out_p1, jnp.zeros_like(x))
    out_p0 = jax.block_until_ready(landmark_dropout(x, seed, p=0.0, training=True))
    assert jnp.array_equal(out_p0, x)

    print("KERNEL_OK")
</pallas_src>

<mosaic_0001>
module attributes {stable_mosaic.version = 11 : i64} {
  func.func @_landmark_dropout_kernel(%arg0: i32, %arg1: memref<1x128xf32, #tpu.memory_space<vmem>>, %arg2: memref<2x128xf32, #tpu.memory_space<vmem>>, %arg3: memref<2x128xf32, #tpu.memory_space<vmem>>) attributes {dimension_semantics = [#tpu.dimension_semantics<parallel>], iteration_bounds = array<i64: 1>, scalar_prefetch = 0 : i64, scratch_operands = 0 : i64, tpu.core_type = #tpu.core_type<tc>, window_params = [{pipeline_mode = #tpu.pipeline_mode<synchronous>, transform_indices = @transform_0, window_bounds = array<i64: 1, 128>}, {transform_indices = @transform_1, window_bounds = array<i64: 2, 128>}, {transform_indices = @transform_2, window_bounds = array<i64: 2, 128>}]} {
    %c0 = arith.constant 0 : index
    %c0_0 = arith.constant 0 : index
    %0 = vector.load %arg2[%c0, %c0_0] : memref<2x128xf32, #tpu.memory_space<vmem>>, vector<2x128xf32>
    %c0_1 = arith.constant 0 : index
    %c0_2 = arith.constant 0 : index
    %1 = vector.load %arg1[%c0_1, %c0_2] : memref<1x128xf32, #tpu.memory_space<vmem>>, vector<1x128xf32>
    %2 = vector.broadcast %1 : vector<1x128xf32> to vector<2x128xf32>
    %3 = arith.mulf %0, %2 : vector<2x128xf32>
    %c0_3 = arith.constant 0 : index
    %c0_4 = arith.constant 0 : index
    %4 = vector.load %arg3[%c0_3, %c0_4] : memref<2x128xf32, #tpu.memory_space<vmem>>, vector<2x128xf32>
    tpu.vector_store %arg3[%c0_3, %c0_4], %3 {strides = array<i32>} : memref<2x128xf32, #tpu.memory_space<vmem>>, vector<2x128xf32>,
    return
  }
  func.func @transform_0(%arg0: i32) -> (i32, i32) {
    %c0_i32 = arith.constant 0 : i32
    %c0_i32_0 = arith.constant 0 : i32
    %c0_i32_1 = arith.constant 0 : i32
    return %c0_i32, %c0_i32_0 : i32, i32
  }
  func.func @transform_1(%arg0: i32) -> (i32, i32) {
    %c0_i32 = arith.constant 0 : i32
    %c0_i32_0 = arith.constant 0 : i32
    return %arg0, %c0_i32 : i32, i32
  }
  func.func @transform_2(%arg0: i32) -> (i32, i32) {
    %c0_i32 = arith.constant 0 : i32
    %c0_i32_0 = arith.constant 0 : i32
    return %arg0, %c0_i32 : i32, i32
  }
}

</mosaic_0001>

<llo_original>
// kernel: tpu_custom_call.1
$region0: #{tpu_custom_call.1}
  #allocation0 [shape = 'u32[]', space=smem, size = 0x4, offset = 0x4, fixed_abs, tag = 'smem constant byte address 0x4 - core index']
  #allocation1 [shape = 'u32[72,128]{1,0:T(1,128)}', space=vmem, size = 0x9000, scoped, tag = 'internal scratch']
  %s0 = inlined_call_operand.hbm [shape: f32[1,128], index: 0, kind: input, shape index: {}]
  %s1 = inlined_call_operand.hbm [shape: f32[2,128], index: 1, kind: input, shape index: {}]
  %s2 = inlined_call_operand.hbm [shape: f32[2,128], index: 2, kind: output, shape index: {}]
  %s3 = sld [smem:[#allocation0]]
  $region26: #{tpu_custom_call.1} parent=0
    _
  %s5 = ssub.s32 1, %s3
  %s6 = scalar_select 0, %s5, %s3
  $region1: #{tpu_custom_call.1} parent=0
    #allocation2 [shape = 'u8[512]{0}', space=vmem, size = 0x400, scoped, tag = 'input window, operand 0, single buffered']
    #allocation3 [shape = 's32[1]{0}', space=sflag, size = 0x4, scoped, tag = 'scoped memory for tpu_custom_call.1']
    #allocation4 [shape = 's32[1]{0}', space=sflag, size = 0x4, scoped, tag = 'scoped memory for tpu_custom_call.1']
    #allocation5 [shape = 'u8[1024]{0}', space=vmem, size = 0x400, scoped, tag = 'input window, operand 1, single buffered']
    #allocation6 [shape = 's32[1]{0}', space=sflag, size = 0x4, scoped, tag = 'scoped memory for tpu_custom_call.1']
    #allocation7 [shape = 'u8[1024]{0}', space=vmem, size = 0x400, scoped, tag = 'output window, operand 0, single buffered']
    %7 = vsyncpa [#allocation3], 0
    %8 = vsyncpa [#allocation6], 0
    %9 = vsyncpa [#allocation4], 0
    // Predicated region
    $region2: #{tpu_custom_call.1} parent=1 // pred_check
      _
    $region3: #{tpu_custom_call.1} parent=1 // pred_check_branch
      %11 = sbr.rel (0) target = $region5
    $region4: #{tpu_custom_call.1} parent=1 // pred_region
      %13 = vsyncadd [#allocation3], 0
      %s15 = sshll.u32 %s0, 4
      %s16 = int_to_ptr.hbm [resolvable:$true] %s15
      %s17 = sshll.u32 [#allocation2], 4
      %s18 = int_to_ptr.vmem [resolvable:$true] %s17
      %20 = dma.hbm_to_vmem [thread:$0]  %s16, 16, %s18, [#allocation3]
    $region5: #{tpu_custom_call.1} parent=1 // pred_fallthru
      _
    // Predicated region
    $region6: #{tpu_custom_call.1} parent=1 // pred_check
      _
    $region7: #{tpu_custom_call.1} parent=1 // pred_check_branch
      %22 = sbr.rel (0) target = $region9
    $region8: #{tpu_custom_call.1} parent=1 // pred_region
      %24 = vsyncadd [#allocation6], 0
      %s26 = sshll.u32 %s1, 4
      %s27 = int_to_ptr.hbm [resolvable:$true] %s26
      %s28 = sshll.u32 [#allocation5], 4
      %s29 = int_to_ptr.vmem [resolvable:$true] %s28
      %31 = dma.hbm_to_vmem [thread:$0]  %s27, 32, %s29, [#allocation6]
    $region9: #{tpu_custom_call.1} parent=1 // pred_fallthru
      _
    // Predicated region
    $region10: #{tpu_custom_call.1} parent=1 // pred_check
      _
    $region11: #{tpu_custom_call.1} parent=1 // pred_check_branch
      %33 = sbr.rel (0) target = $region13
    $region12: #{tpu_custom_call.1} parent=1 // pred_region
      %35 = dma.done [#allocation3], 16
    $region13: #{tpu_custom_call.1} parent=1 // pred_fallthru
      _
    // Predicated region
    $region14: #{tpu_custom_call.1} parent=1 // pred_check
      _
    $region15: #{tpu_custom_call.1} parent=1 // pred_check_branch
      %37 = sbr.rel (0) target = $region17
    $region16: #{tpu_custom_call.1} parent=1 // pred_region
      %39 = dma.done [#allocation6], 32
    $region17: #{tpu_custom_call.1} parent=1 // pred_fallthru
      _
    %v40 = vld [vmem:[#allocation5] sm:$0x3]
    %v41 = vld [vmem:[#allocation2] sm:$0x1]
    %v43 = vperm.slane %v41, 0
    %v45 = vmul.f32 %v40, %v43
    %46 = vst [vmem:[#allocation7] sm:$0x3] %v45
    // Predicated region
    $region18: #{tpu_custom_call.1} parent=1 // pred_check
      _
    $region19: #{tpu_custom_call.1} parent=1 // pred_check_branch
      %48 = sbr.rel (0) target = $region21
    $region20: #{tpu_custom_call.1} parent=1 // pred_region
      %50 = vsyncadd [#allocation4], 0
      %s52 = sshll.u32 [#allocation7], 4
      %s53 = int_to_ptr.vmem [resolvable:$true] %s52
      %s54 = sshll.u32 %s2, 4
      %s55 = int_to_ptr.hbm [resolvable:$true] %s54
      %57 = dma.vmem_to_hbm [thread:$0]  %s53, 32, %s55, [#allocation4]
    $region21: #{tpu_custom_call.1} parent=1 // pred_fallthru
      _
    // Predicated region
    $region22: #{tpu_custom_call.1} parent=1 // pred_check
      _
    $region23: #{tpu_custom_call.1} parent=1 // pred_check_branch
      %59 = sbr.rel (0) target = $region25
    $region24: #{tpu_custom_call.1} parent=1 // pred_region
      %61 = dma.done [#allocation4], 32
    $region25: #{tpu_custom_call.1} parent=1 // pred_fallthru
      _
    %62 = vsyncpa [#allocation3], 1
    %63 = vsyncpa [#allocation6], 1
    %64 = vsyncpa [#allocation4], 1

</llo_original>
